<compile_context>
chip_gen: v6e
topology: v6e:2x2x1
jax: 0.10.0
libtpu: 0.0.40
codegen_flags: <defaults>
</compile_context>

<pallas_src>
import functools
import math

import jax
import jax.numpy as jnp
import numpy as np
from jax import lax
from jax.experimental import pallas as pl
from jax.experimental.pallas import tpu as pltpu


def make_fixed_pos_encoding(series_len, embedding_dim, scale_factor=1.0,
                            dtype=jnp.float32):
    """Builds the (S, 1, C) sinusoidal table exactly like the torch module init.

    Build (and store) it once at model setup in the activation dtype.
    """
    assert embedding_dim % 2 == 0, "embedding_dim must be even (as in torch module)"
    position = jnp.arange(series_len, dtype=jnp.float32)[:, None]              # (S, 1)
    div_term = jnp.exp(jnp.arange(0, embedding_dim, 2, dtype=jnp.float32)
                       * (-math.log(10000.0) / embedding_dim))                 # (C/2,)
    angles = position * div_term                                               # (S, C/2)
    pe = jnp.stack([jnp.sin(angles), jnp.cos(angles)], axis=-1)                # sin even, cos odd
    pe = scale_factor * pe.reshape(series_len, embedding_dim)                  # (S, C)
    return pe[:, None, :].astype(dtype)                                        # (S, 1, C)


_SEED_MIX = -1640531527   # 0x9E3779B9 as int32
_MIX1 = -2048144789       # 0x85EBCA6B (murmur3 fmix32 constant)
_MIX2 = -1028477387       # 0xC2B2AE35 (murmur3 fmix32 constant)


def _pos_enc_kernel(seed_ref, x_ref, pe_ref, o_ref, *, dropout_p, block_rows, batch):
    x = x_ref[...]                       # (tS, B*C)  lane-dense, no sublane padding
    pos = pe_ref[...]                    # (tS, C)
    if batch > 1:
        # Tile pe across the batch along the lane axis: column b*C + c <- pe[:, c].
        # Lane-dim concat of 128-aligned chunks is a cheap vreg placement.
        pos = jnp.concatenate([pos] * batch, axis=-1)          # (tS, B*C)
    y = x + pos                          # native-dtype VPU add

    if dropout_p > 0.0:
        t_s, width = x.shape
        row0 = pl.program_id(0) * block_rows
        # Tiling-invariant flat element id: 2 iotas + 3 int ops.
        r = lax.broadcasted_iota(jnp.int32, (t_s, width), 0) + row0
        c = lax.broadcasted_iota(jnp.int32, (t_s, width), 1)
        idx = r * jnp.int32(width) + c
        # Counter-based hash (mul / xorshift / mul); wrapping int32 math only.
        h = (idx ^ (seed_ref[0] * jnp.int32(_SEED_MIX))) * jnp.int32(_MIX1)
        h = (h ^ lax.shift_right_logical(h, 16)) * jnp.int32(_MIX2)
        # Keep iff top 23 bits >= p * 2^23  ->  P(keep) = 1 - p.  No float path.
        thresh = jnp.int32(int(round(dropout_p * (1 << 23))))
        keep = lax.shift_right_logical(h, 9) >= thresh
        # Inverted dropout; scale in f32 so bf16 inputs see no systematic bias.
        # TODO(synk): for bf16 activations, derive two keep bits per 32-bit hash
        # (top/bottom 16 bits) to halve hash cost on v6e/v7x bf16 paths.
        scale = jnp.float32(1.0 / (1.0 - dropout_p))
        y = jnp.where(keep, y * scale, jnp.float32(0.0))

    o_ref[...] = y.astype(o_ref.dtype)


def fixed_pos_enc(x, pe, seed, *, dropout_p=0.1, block_rows=None,
                  target_block_bytes=4 << 20):
    """Training-mode forward.  x: (S, B, C); pe: (S, 1, C) or (S, C) in x.dtype;
    seed: (1,) int32 (vary per training step)."""
    S, B, C = x.shape
    pe2d = pe.reshape(S, C) if pe.ndim == 3 else pe
    assert pe2d.shape == (S, C)
    assert pe2d.dtype == x.dtype, "store pe in the activation dtype at model setup"
    assert 0.0 <= dropout_p < 1.0
    assert S * B * C < 2**31, "int32 flat element index would overflow"

    W = B * C
    x2d = x.reshape(S, W)                       # free view (merges trailing dims)

    # --- S-tile sizing: big enough to amortize the ~0.35us/step overhead, small
    # enough that the double-buffered footprint stays well inside VMEM on every
    # generation (v7x has only 64 MiB physical).
    row_bytes = W * x.dtype.itemsize
    if block_rows is None:
        block_rows = max(1, min(target_block_bytes, 8 << 20) // max(row_bytes, 1))
    block_rows = int(min(block_rows, S))
    if block_rows < S:
        block_rows = min(S, max(8, (block_rows // 8) * 8))   # sublane-aligned tiles

    x_blk = block_rows * W * x.dtype.itemsize
    pe_blk = block_rows * C * pe2d.dtype.itemsize
    tmp = 2 * block_rows * W * 4                 # int32/f32 dropout temporaries
    footprint = 2 * (2 * x_blk + pe_blk) + tmp
    vmem_limit = int(min(max(footprint + (4 << 20), 32 << 20), 48 << 20))

    grid = (pl.cdiv(S, block_rows),)
    kernel = functools.partial(_pos_enc_kernel, dropout_p=float(dropout_p),
                               block_rows=block_rows, batch=B)

    out2d = pl.pallas_call(
        kernel,
        out_shape=jax.ShapeDtypeStruct((S, W), x.dtype),
        grid=grid,
        in_specs=[
            pl.BlockSpec(memory_space=pltpu.SMEM),                  # seed scalar
            pl.BlockSpec((block_rows, W), lambda i: (i, 0)),        # x tile (S, B*C)
            pl.BlockSpec((block_rows, C), lambda i: (i, 0)),        # pe tile (S, C)
        ],
        out_specs=pl.BlockSpec((block_rows, W), lambda i: (i, 0)),
        compiler_params=pltpu.CompilerParams(
            dimension_semantics=("parallel",),       # shard S across TCs where supported
            vmem_limit_bytes=vmem_limit),
    )(seed, x2d, pe2d)

    return out2d.reshape(S, B, C)                # free view back to (S, B, C)


if __name__ == "__main__":
    # Small shapes consistent with the module's (S, B, C) contract.
    series_len = 16
    batch = 4
    embedding_dim = 128          # multiple of 128 -> lane-dense loads/stores
    dropout = 0.1

    key = jax.random.PRNGKey(0)
    x = jax.random.normal(key, (series_len, batch, embedding_dim), dtype=jnp.float32)
    pe = make_fixed_pos_encoding(series_len, embedding_dim, scale_factor=1.0,
                                 dtype=x.dtype)   # stored once in activation dtype
    seed = jnp.array([1234], dtype=jnp.int32)

    # Eval-mode check (dropout disabled): out == x + pe, broadcast over batch.
    out_eval = jax.block_until_ready(
        fixed_pos_enc(x, pe, seed, dropout_p=0.0, block_rows=8))   # grid=(2,)
    ref = np.asarray(x) + np.asarray(pe)
    np.testing.assert_allclose(np.asarray(out_eval), ref, rtol=1e-6, atol=1e-6)

    # Training-mode forward with dropout p=0.1.
    # (Mask values differ from torch's RNG stream; statistics match nn.Dropout.)
    out_train = jax.block_until_ready(
        fixed_pos_enc(x, pe, seed, dropout_p=dropout, block_rows=8))
    assert out_train.shape == (series_len, batch, embedding_dim)
    assert out_train.dtype == jnp.float32
    out_np = np.asarray(out_train)
    scaled = ref / (1.0 - dropout)
    elem_ok = (np.isclose(out_np, 0.0, atol=1e-6)
               | np.isclose(out_np, scaled, rtol=1e-5, atol=1e-6))
    assert elem_ok.all(), "training output must be 0 or (x+pe)/(1-p) elementwise"
    drop_rate = np.isclose(out_np, 0.0, atol=1e-6).mean()
    assert 0.05 <= drop_rate <= 0.18, f"unexpected drop rate {drop_rate}"

    # Tiling invariance: a different S-tiling must produce the identical mask.
    out_train2 = jax.block_until_ready(
        fixed_pos_enc(x, pe, seed, dropout_p=dropout, block_rows=None))  # single tile
    assert np.array_equal(np.asarray(out_train2), out_np), "mask must not depend on tiling"

    print("KERNEL_OK")
</pallas_src>

<mosaic_0001>
module attributes {stable_mosaic.version = 11 : i64} {
  func.func @_pos_enc_kernel(%arg0: i32, %arg1: memref<1xi32, #tpu.memory_space<smem>>, %arg2: memref<8x512xf32, #tpu.memory_space<vmem>>, %arg3: memref<8x128xf32, #tpu.memory_space<vmem>>, %arg4: memref<8x512xf32, #tpu.memory_space<vmem>>) attributes {dimension_semantics = [#tpu.dimension_semantics<parallel>], iteration_bounds = array<i64: 2>, scalar_prefetch = 0 : i64, scratch_operands = 0 : i64, tpu.core_type = #tpu.core_type<tc>, window_params = [{transform_indices = @transform_0, window_bounds = array<i64: 1>}, {transform_indices = @transform_1, window_bounds = array<i64: 8, 512>}, {transform_indices = @transform_2, window_bounds = array<i64: 8, 128>}, {transform_indices = @transform_3, window_bounds = array<i64: 8, 512>}]} {
    %c0 = arith.constant 0 : index
    %c0_0 = arith.constant 0 : index
    %0 = vector.load %arg2[%c0, %c0_0] : memref<8x512xf32, #tpu.memory_space<vmem>>, vector<8x512xf32>
    %c0_1 = arith.constant 0 : index
    %c0_2 = arith.constant 0 : index
    %1 = vector.load %arg3[%c0_1, %c0_2] : memref<8x128xf32, #tpu.memory_space<vmem>>, vector<8x128xf32>
    %2 = tpu.concatenate %1, %1, %1, %1 in 1 : vector<8x128xf32>, vector<8x128xf32>, vector<8x128xf32>, vector<8x128xf32> -> vector<8x512xf32>
    %3 = arith.addf %0, %2 : vector<8x512xf32>
    %c0_3 = arith.constant 0 : index
    %c0_4 = arith.constant 0 : index
    %4 = vector.load %arg4[%c0_3, %c0_4] : memref<8x512xf32, #tpu.memory_space<vmem>>, vector<8x512xf32>
    tpu.vector_store %arg4[%c0_3, %c0_4], %3 {strides = array<i32>} : memref<8x512xf32, #tpu.memory_space<vmem>>, vector<8x512xf32>,
    return
  }
  func.func @transform_0(%arg0: i32) -> i32 {
    %c0_i32 = arith.constant 0 : i32
    %c0_i32_0 = arith.constant 0 : i32
    return %c0_i32 : i32
  }
  func.func @transform_1(%arg0: i32) -> (i32, i32) {
    %c0_i32 = arith.constant 0 : i32
    %c0_i32_0 = arith.constant 0 : i32
    return %arg0, %c0_i32 : i32, i32
  }
  func.func @transform_2(%arg0: i32) -> (i32, i32) {
    %c0_i32 = arith.constant 0 : i32
    %c0_i32_0 = arith.constant 0 : i32
    return %arg0, %c0_i32 : i32, i32
  }
  func.func @transform_3(%arg0: i32) -> (i32, i32) {
    %c0_i32 = arith.constant 0 : i32
    %c0_i32_0 = arith.constant 0 : i32
    return %arg0, %c0_i32 : i32, i32
  }
}

</mosaic_0001>

<llo_original>
// kernel: tpu_custom_call.1
$region0: #{tpu_custom_call.1}
  #allocation0 [shape = 'u32[]', space=smem, size = 0x4, offset = 0x4, fixed_abs, tag = 'smem constant byte address 0x4 - core index']
  #allocation1 [shape = 'u32[144,128]{1,0:T(1,128)}', space=vmem, size = 0x12000, scoped, tag = 'internal scratch']
  #allocation2 [shape = 's32[1]{0:T(128)S(6)}', space=smem, size = 0x200, scoped, tag = 'scoped memory for tpu_custom_call.1']
  %s0 = inlined_call_operand.<no memory space> [shape: s32[1], index: 0, kind: input, shape index: {}]
  %s1 = inlined_call_operand.hbm [shape: f32[16,512], index: 1, kind: input, shape index: {}]
  %s2 = inlined_call_operand.hbm [shape: f32[16,128], index: 2, kind: input, shape index: {}]
  %s3 = inlined_call_operand.hbm [shape: f32[16,512], index: 3, kind: output, shape index: {}]
  %s4 = sld [smem:[#allocation0]]
  $region53: #{tpu_custom_call.1} parent=0
    _
  %s6 = ssub.s32 1, %s4
  %s7 = scalar_select 0, %s6, %s4
  %8 = sst [smem:[#allocation2]] %s0
  $region1: #{tpu_custom_call.1} parent=0
    #allocation3 [shape = 'u8[32768]{0}', space=vmem, size = 0x8000, scoped, tag = 'input window, operand 1']
    #allocation4 [shape = 's32[2]{0}', space=sflag, size = 0x8, scoped, tag = 'scoped memory for tpu_custom_call.1']
    #allocation5 [shape = 's32[2]{0}', space=sflag, size = 0x8, scoped, tag = 'scoped memory for tpu_custom_call.1']
    #allocation6 [shape = 'u8[8192]{0}', space=vmem, size = 0x2000, scoped, tag = 'input window, operand 2']
    #allocation7 [shape = 's32[2]{0}', space=sflag, size = 0x8, scoped, tag = 'scoped memory for tpu_custom_call.1']
    #allocation8 [shape = 'u8[32768]{0}', space=vmem, size = 0x8000, scoped, tag = 'output window, operand 0']
    %9 = vsyncpa [#allocation4], 0
    %s10 = scalar_lea.sflag [#allocation4], 1
    %11 = vsyncpa %s10, 0
    %12 = vsyncpa [#allocation7], 0
    %s13 = scalar_lea.sflag [#allocation7], 1
    %14 = vsyncpa %s13, 0
    %15 = vsyncpa [#allocation5], 0
    %s16 = scalar_lea.sflag [#allocation5], 1
    %17 = vsyncpa %s16, 0
    loop: start=0, step=1, limit=4
    $region2: #{tpu_custom_call.1} parent=1 // loop_pre_header
      _
    $region3: #{tpu_custom_call.1} parent=1 // loop_header
      %s19 = sphi 0, %s23
      %p20 = scmp.ge.s32.totalorder %s19, 4
      %s27 = sphi 0, %s27
      %s29 = sphi 0, %s27
      %s30 = sphi 0, %s29
      %s44 = sphi 0, %s30
      %s50 = sphi 0, %s52
      %s53 = sphi 0, %s50
      %s54 = sphi 0, %s53
      %s70 = sphi 0, %s54
      %s76 = sphi 0, %s78
      %s79 = sphi 0, %s76
      %s80 = sphi 0, %s79
      %s96 = sphi 0, %s80
      %s102 = sphi 0, %s104
      %s105 = sphi 0, %s102
      %s106 = sphi 0, %s105
      %s122 = sphi 0, %s106
    $region4: #{tpu_custom_call.1} parent=1 // loop_header_branch
      %22 = sbr.rel (%p20) target = $region8
    $region5: #{tpu_custom_call.1} parent=1 // loop_body
      %s24 = ssub.s32 %s19, 1
      %s25 = ssub.s32 %s19, 2
      %s26 = sadd.s32 %s19, 1
      %s28 = sadd.s32 %s27, 1
      %p31 = scmp.eq.s32.totalorder %s19, 1
      %p32 = scmp.ne.s32.totalorder %s27, %s29
      %p33 = scmp.eq.s32.totalorder %s19, 0
      %p34 = por %p32, %p33
      %p35 = scmp.ne.s32.totalorder %s27, %s29
      %p36 = scmp.eq.s32.totalorder %s24, 1
      %p37 = por %p35, %p36
      %p38 = scmp.ne.s32.totalorder %s29, %s30
      %p39 = scmp.eq.s32.totalorder %s24, 0
      %p40 = por %p38, %p39
      %p41 = scmp.ne.s32.totalorder %s29, %s30
      %p42 = scmp.eq.s32.totalorder %s25, 1
      %p43 = por %p41, %p42
      %p45 = scmp.ne.s32.totalorder %s30, %s44
      %p46 = scmp.eq.s32.totalorder %s25, 0
      %p47 = por %p45, %p46
      %s48 = ssub.s32 %s19, %s26
      %p49 = scmp.eq.s32.totalorder %s48, 0
      %s51 = sadd.s32 %s50, 1
      %s52 = scalar_select %p49, %s50, %s51
      %p55 = pneg %p49
      %p56 = scmp.eq.s32.totalorder %s19, 1
      %p57 = por %p55, %p56
      %p58 = scmp.ne.s32.totalorder %s50, %s53
      %p59 = scmp.eq.s32.totalorder %s19, 0
      %p60 = por %p58, %p59
      %p61 = scmp.ne.s32.totalorder %s50, %s53
      %p62 = scmp.eq.s32.totalorder %s24, 1
      %p63 = por %p61, %p62
      %p64 = scmp.ne.s32.totalorder %s53, %s54
      %p65 = scmp.eq.s32.totalorder %s24, 0
      %p66 = por %p64, %p65
      %p67 = scmp.ne.s32.totalorder %s53, %s54
      %p68 = scmp.eq.s32.totalorder %s25, 1
      %p69 = por %p67, %p68
      %p71 = scmp.ne.s32.totalorder %s54, %s70
      %p72 = scmp.eq.s32.totalorder %s25, 0
      %p73 = por %p71, %p72
      %s74 = ssub.s32 %s19, %s26
      %p75 = scmp.eq.s32.totalorder %s74, 0
      %s77 = sadd.s32 %s76, 1
      %s78 = scalar_select %p75, %s76, %s77
      %p81 = pneg %p75
      %p82 = scmp.eq.s32.totalorder %s19, 1
      %p83 = por %p81, %p82
      %p84 = scmp.ne.s32.totalorder %s76, %s79
      %p85 = scmp.eq.s32.totalorder %s19, 0
      %p86 = por %p84, %p85
      %p87 = scmp.ne.s32.totalorder %s76, %s79
      %p88 = scmp.eq.s32.totalorder %s24, 1
      %p89 = por %p87, %p88
      %p90 = scmp.ne.s32.totalorder %s79, %s80
      %p91 = scmp.eq.s32.totalorder %s24, 0
      %p92 = por %p90, %p91
      %p93 = scmp.ne.s32.totalorder %s79, %s80
      %p94 = scmp.eq.s32.totalorder %s25, 1
      %p95 = por %p93, %p94
      %p97 = scmp.ne.s32.totalorder %s80, %s96
      %p98 = scmp.eq.s32.totalorder %s25, 0
      %p99 = por %p97, %p98
      %s100 = ssub.s32 %s19, %s26
      %p101 = scmp.eq.s32.totalorder %s100, 0
      %s103 = sadd.s32 %s102, 1
      %s104 = scalar_select %p101, %s102, %s103
      %p107 = pneg %p101
      %p108 = scmp.eq.s32.totalorder %s19, 1
      %p109 = por %p107, %p108
      %p110 = scmp.ne.s32.totalorder %s102, %s105
      %p111 = scmp.eq.s32.totalorder %s19, 0
      %p112 = por %p110, %p111
      %p113 = scmp.ne.s32.totalorder %s102, %s105
      %p114 = scmp.eq.s32.totalorder %s24, 1
      %p115 = por %p113, %p114
      %p116 = scmp.ne.s32.totalorder %s105, %s106
      %p117 = scmp.eq.s32.totalorder %s24, 0
      %p118 = por %p116, %p117
      %p119 = scmp.ne.s32.totalorder %s105, %s106
      %p120 = scmp.eq.s32.totalorder %s25, 1
      %p121 = por %p119, %p120
      %p123 = scmp.ne.s32.totalorder %s106, %s122
      %p124 = scmp.eq.s32.totalorder %s25, 0
      %p125 = por %p123, %p124
      %p126 = scmp.le.s32.totalorder 1, %s19
      %p127 = scmp.lt.s32.totalorder %s19, 3
      %p128 = pnand %p126, %p127
      %p129 = pneg %p128
      // Predicated region
      $region9: #{tpu_custom_call.1} parent=5 // pred_check
        _
      $region10: #{tpu_custom_call.1} parent=5 // pred_check_branch
        %131 = sbr.rel (%p128) target = $region12
      $region11: #{tpu_custom_call.1} parent=5 // pred_region
        %s132 = ssub.s32 %s19, 1
        // Predicated region
        $region13: #{tpu_custom_call.1} parent=11 // pred_check
          %p133 = pneg %p40
        $region14: #{tpu_custom_call.1} parent=11 // pred_check_branch
          %135 = sbr.rel (%p133) target = $region16
        $region15: #{tpu_custom_call.1} parent=11 // pred_region
          _
        $region16: #{tpu_custom_call.1} parent=11 // pred_fallthru
          _
      $region12: #{tpu_custom_call.1} parent=5 // pred_fallthru
        _
      %p136 = scmp.lt.s32.totalorder %s19, 2
      // Predicated region
      $region17: #{tpu_custom_call.1} parent=5 // pred_check
        %p137 = pneg %p136
      $region18: #{tpu_custom_call.1} parent=5 // pred_check_branch
        %139 = sbr.rel (%p137) target = $region20
      $region19: #{tpu_custom_call.1} parent=5 // pred_region
        // Predicated region
        $region21: #{tpu_custom_call.1} parent=19 // pred_check
          %p140 = pneg %p60
        $region22: #{tpu_custom_call.1} parent=19 // pred_check_branch
          %142 = sbr.rel (%p140) target = $region24
        $region23: #{tpu_custom_call.1} parent=19 // pred_region
          %s143 = sand.u32 %s50, 1
          %s144 = scalar_lea.sflag [#allocation4], %s143
          %s145 = sand.u32 %s50, 1
          %s146 = smul.addr %s145, 32
          %s147 = scalar_lea.vmem [#allocation3], %s146
          %s149 = ssub.s32 512, 512
          %150 = vsyncadd %s144, %s149
          %s151 = smul.addr %s19, 4
          %s152 = smul.addr %s151, 128
          %s153 = scalar_lea.hbm %s1, %s152
          %s155 = sshll.u32 %s147, 4
          %s156 = int_to_ptr.vmem [resolvable:$true] %s155
          %158 = dma.hbm_to_vmem [thread:$0]  %s153, 512, %s156, %s144
        $region24: #{tpu_custom_call.1} parent=19 // pred_fallthru
          _
        // Predicated region
        $region25: #{tpu_custom_call.1} parent=19 // pred_check
          %p159 = pneg %p86
        $region26: #{tpu_custom_call.1} parent=19 // pred_check_branch
          %161 = sbr.rel (%p159) target = $region28
        $region27: #{tpu_custom_call.1} parent=19 // pred_region
          %s162 = sand.u32 %s76, 1
          %s163 = scalar_lea.sflag [#allocation7], %s162
          %s164 = sand.u32 %s76, 1
          %s165 = smul.addr %s164, 8
          %s166 = scalar_lea.vmem [#allocation6], %s165
          %s168 = ssub.s32 128, 128
          %169 = vsyncadd %s163, %s168
          %s170 = smul.addr %s19, 128
          %s171 = scalar_lea.hbm %s2, %s170
          %s173 = sshll.u32 %s166, 4
          %s174 = int_to_ptr.vmem [resolvable:$true] %s173
          %176 = dma.hbm_to_vmem [thread:$0]  %s171, 128, %s174, %s163
        $region28: #{tpu_custom_call.1} parent=19 // pred_fallthru
          _
      $region20: #{tpu_custom_call.1} parent=5 // pred_fallthru
        _
      %p177 = scmp.le.s32.totalorder 1, %s19
      %p178 = scmp.lt.s32.totalorder %s19, 3
      %p179 = pnand %p177, %p178
      %p180 = pneg %p179
      // Predicated region
      $region29: #{tpu_custom_call.1} parent=5 // pred_check
        _
      $region30: #{tpu_custom_call.1} parent=5 // pred_check_branch
        %182 = sbr.rel (%p179) target = $region32
      $region31: #{tpu_custom_call.1} parent=5 // pred_region
        %s183 = ssub.s32 %s19, 1
        %s184 = sand.u32 %s53, 1
        %s185 = scalar_lea.sflag [#allocation4], %s184
        %s186 = sand.u32 %s53, 1
        %s187 = smul.addr %s186, 32
        %s188 = scalar_lea.vmem [#allocation3], %s187
        // Predicated region
        $region33: #{tpu_custom_call.1} parent=31 // pred_check
          %p189 = pneg %p66
        $region34: #{tpu_custom_call.1} parent=31 // pred_check_branch
          %191 = sbr.rel (%p189) target = $region36
        $region35: #{tpu_custom_call.1} parent=31 // pred_region
          %192 = dma.done %s185, 512
        $region36: #{tpu_custom_call.1} parent=31 // pred_fallthru
          _
        %s193 = sand.u32 %s79, 1
        %s194 = scalar_lea.sflag [#allocation7], %s193
        %s195 = sand.u32 %s79, 1
        %s196 = smul.addr %s195, 8
        %s197 = scalar_lea.vmem [#allocation6], %s196
        // Predicated region
        $region37: #{tpu_custom_call.1} parent=31 // pred_check
          %p198 = pneg %p92
        $region38: #{tpu_custom_call.1} parent=31 // pred_check_branch
          %200 = sbr.rel (%p198) target = $region40
        $region39: #{tpu_custom_call.1} parent=31 // pred_region
          %201 = dma.done %s194, 128
        $region40: #{tpu_custom_call.1} parent=31 // pred_fallthru
          _
        %p202 = pneg %p40
        %p203 = pneg %p37
        %s204 = sand.u32 %s53, 1
        %s205 = scalar_lea.sflag [#allocation4], %s204
        %s206 = sand.u32 %s53, 1
        %s207 = smul.addr %s206, 32
        %s208 = scalar_lea.vmem [#allocation3], %s207
        %p209 = pneg %p66
        %p210 = pneg %p63
        %s211 = sand.u32 %s79, 1
        %s212 = scalar_lea.sflag [#allocation7], %s211
        %s213 = sand.u32 %s79, 1
        %s214 = smul.addr %s213, 8
        %s215 = scalar_lea.vmem [#allocation6], %s214
        %p216 = pneg %p92
        %p217 = pneg %p89
        %p218 = pneg %p118
        %p219 = pneg %p115
        %s220 = sand.u32 %s105, 1
        %s221 = scalar_lea.sflag [#allocation5], %s220
        %s222 = sand.u32 %s105, 1
        %s223 = smul.addr %s222, 32
        %s224 = scalar_lea.vmem [#allocation8], %s223
        %v225 = vld [vmem:[%s188] sm:$0xff]
        %v226 = vld [vmem:[%s188 + $0x8] sm:$0xff]
        %v227 = vld [vmem:[%s188 + $0x10] sm:$0xff]
        %v228 = vld [vmem:[%s188 + $0x18] sm:$0xff]
        %v229 = vld [vmem:[%s197] sm:$0xff]
        %v230 = vadd.f32 %v225, %v229
        %v231 = vadd.f32 %v226, %v229
        %v232 = vadd.f32 %v227, %v229
        %v233 = vadd.f32 %v228, %v229
        %234 = vst [vmem:[%s224] sm:$0xff] %v230
        %235 = vst [vmem:[%s224 + $0x8] sm:$0xff] %v231
        %236 = vst [vmem:[%s224 + $0x10] sm:$0xff] %v232
        %237 = vst [vmem:[%s224 + $0x18] sm:$0xff] %v233
        %s238 = sand.u32 %s105, 1
        %s239 = scalar_lea.sflag [#allocation5], %s238
        %s240 = sand.u32 %s105, 1
        %s241 = smul.addr %s240, 32
        %s242 = scalar_lea.vmem [#allocation8], %s241
        // Predicated region
        $region41: #{tpu_custom_call.1} parent=31 // pred_check
          %p243 = pneg %p115
        $region42: #{tpu_custom_call.1} parent=31 // pred_check_branch
          %245 = sbr.rel (%p243) target = $region44
        $region43: #{tpu_custom_call.1} parent=31 // pred_region
          %s247 = ssub.s32 512, 512
          %248 = vsyncadd %s239, %s247
          %s249 = smul.addr %s24, 4
          %s250 = smul.addr %s249, 128
          %s251 = scalar_lea.hbm %s3, %s250
          %s253 = sshll.u32 %s242, 4
          %s254 = int_to_ptr.vmem [resolvable:$true] %s253
          %256 = dma.vmem_to_hbm [thread:$0]  %s254, 512, %s251, %s239
        $region44: #{tpu_custom_call.1} parent=31 // pred_fallthru
          _
      $region32: #{tpu_custom_call.1} parent=5 // pred_fallthru
        _
      %p257 = scmp.le.s32.totalorder 2, %s19
      // Predicated region
      $region45: #{tpu_custom_call.1} parent=5 // pred_check
        %p258 = pneg %p257
      $region46: #{tpu_custom_call.1} parent=5 // pred_check_branch
        %260 = sbr.rel (%p258) target = $region48
      $region47: #{tpu_custom_call.1} parent=5 // pred_region
        %s261 = ssub.s32 %s19, 2
        // Predicated region
        $region49: #{tpu_custom_call.1} parent=47 // pred_check
          %p262 = pneg %p121
        $region50: #{tpu_custom_call.1} parent=47 // pred_check_branch
          %264 = sbr.rel (%p262) target = $region52
        $region51: #{tpu_custom_call.1} parent=47 // pred_region
          %s265 = sand.u32 %s106, 1
          %s266 = scalar_lea.sflag [#allocation5], %s265
          %s267 = sand.u32 %s106, 1
          %s268 = smul.addr %s267, 32
          %s269 = scalar_lea.vmem [#allocation8], %s268
          %270 = dma.done %s266, 512
        $region52: #{tpu_custom_call.1} parent=47 // pred_fallthru
          _
      $region48: #{tpu_custom_call.1} parent=5 // pred_fallthru
        _
    $region6: #{tpu_custom_call.1} parent=1 // loop_footer
      %s23 = sadd.s32 1, %s19
    $region7: #{tpu_custom_call.1} parent=1 // loop_footer_branch
      %18 = sbr.rel target = $region3
    $region8: #{tpu_custom_call.1} parent=1 // loop_exit
      _
    %271 = vsyncpa [#allocation4], 1
    %s272 = scalar_lea.sflag [#allocation4], 1
    %273 = vsyncpa %s272, 1
    %274 = vsyncpa [#allocation7], 1
    %s275 = scalar_lea.sflag [#allocation7], 1
    %276 = vsyncpa %s275, 1
    %277 = vsyncpa [#allocation5], 1
    %s278 = scalar_lea.sflag [#allocation5], 1
    %279 = vsyncpa %s278, 1

</llo_original>
